<compile_context>
chip_gen: v7x
topology: tpu7x:2x2x1
jax: 0.10.0
libtpu: 0.0.40
codegen_flags: <defaults>
</compile_context>

<pallas_src>
import functools

import jax
import jax.numpy as jnp
from jax.experimental import pallas as pl
from jax.experimental.pallas import tpu as pltpu

LANE = 128


def _round_up(x, m):
    return ((x + m - 1) // m) * m


def _discriminator_kernel(x_ref, w1_ref, b1_ref, w2_ref, b2_ref, o_ref):
    # x_ref: [TB, IMG] bf16, w1_ref: [IMG, HP] bf16, b1_ref: [1, HP] f32
    # w2_ref: [HP, OP] bf16,  b2_ref: [1, OP]  f32,  o_ref: [TB, OP] f32
    # First linear (MXU, bf16 in / f32 acc) + bias + ReLU (VPU, f32)
    h = jnp.dot(x_ref[...], w1_ref[...], preferred_element_type=jnp.float32)
    h = jnp.maximum(h + b1_ref[...], 0.0)

    # Second linear (MXU) + bias + sigmoid.
    logits = jnp.dot(h.astype(w2_ref.dtype), w2_ref[...],
                     preferred_element_type=jnp.float32)
    logits = logits + b2_ref[...]
    # sigmoid(x) = 1 / (1 + exp(-x)); exp and approx-reciprocal both run on the
    # EUP, leaving the VALU/store path free. Padded lanes produce sigmoid(0)=0.5
    # which the wrapper slices away.
    o_ref[...] = pl.reciprocal(1.0 + jnp.exp(-logits), approx=True)


@functools.partial(jax.jit, static_argnames=("tb",))
def discriminator_forward(x, w1, b1, w2, b2, *, tb=512):
    """x: [B, image_size]; w1: [image_size, hidden]; b1: [1, hidden];
    w2: [hidden, output_dim]; b2: [1, output_dim]. Returns [B, output_dim] f32."""
    B, img = x.shape
    hidden = w1.shape[1]
    out_dim = w2.shape[1]

    # Lane-dense padded sizes for the hidden and output feature dims.
    HP = _round_up(hidden, LANE)
    OP = _round_up(out_dim, LANE)

    # Zero-padded, pre-transposed ([in, out]) bf16 weights; f32 biases.
    w1p = jnp.zeros((img, HP), jnp.bfloat16).at[:, :hidden].set(
        w1.astype(jnp.bfloat16))
    b1p = jnp.zeros((1, HP), jnp.float32).at[:, :hidden].set(
        b1.astype(jnp.float32))
    w2p = jnp.zeros((HP, OP), jnp.bfloat16).at[:hidden, :out_dim].set(
        w2.astype(jnp.bfloat16))
    b2p = jnp.zeros((1, OP), jnp.float32).at[:, :out_dim].set(
        b2.astype(jnp.float32))

    # Batch tiling: TB rows per grid step (multiple of 8), batch zero-padded to
    # a multiple of TB so every block is full.
    TB = min(tb, _round_up(B, 8))
    Bp = _round_up(B, TB)
    xp = x.astype(jnp.bfloat16)
    if Bp != B:
        xp = jnp.pad(xp, ((0, Bp - B), (0, 0)))

    grid = (Bp // TB,)

    cost = pl.CostEstimate(
        flops=2 * Bp * (img * HP + HP * OP),
        transcendentals=Bp * OP,
        bytes_accessed=(xp.size * 2 + w1p.size * 2 + w2p.size * 2
                        + b1p.size * 4 + b2p.size * 4 + Bp * OP * 4),
    )

    out_padded = pl.pallas_call(
        _discriminator_kernel,
        out_shape=jax.ShapeDtypeStruct((Bp, OP), jnp.float32),
        grid=grid,
        in_specs=[
            pl.BlockSpec((TB, img), lambda i: (i, 0)),   # x tile (pipelined)
            pl.BlockSpec((img, HP), lambda i: (0, 0)),   # W1 (resident)
            pl.BlockSpec((1, HP), lambda i: (0, 0)),     # b1 (resident)
            pl.BlockSpec((HP, OP), lambda i: (0, 0)),    # W2 (resident)
            pl.BlockSpec((1, OP), lambda i: (0, 0)),     # b2 (resident)
        ],
        out_specs=pl.BlockSpec((TB, OP), lambda i: (i, 0)),
        compiler_params=pltpu.CompilerParams(
            dimension_semantics=("parallel",),
        ),
        cost_estimate=cost,
    )(xp, w1p, b1p, w2p, b2p)

    # Strip batch and lane padding.
    return out_padded[:B, :out_dim]


def init_discriminator_params(key, image_size, hidden_dim, output_dim):
    """PyTorch nn.Linear-style init (uniform +-1/sqrt(fan_in)); weights stored
    transposed ([in, out]) relative to PyTorch's [out, in]."""
    k1, k2, k3, k4 = jax.random.split(key, 4)
    bound1 = 1.0 / jnp.sqrt(image_size)
    bound2 = 1.0 / jnp.sqrt(hidden_dim)
    w1 = jax.random.uniform(k1, (image_size, hidden_dim), jnp.float32, -bound1, bound1)
    b1 = jax.random.uniform(k2, (1, hidden_dim), jnp.float32, -bound1, bound1)
    w2 = jax.random.uniform(k3, (hidden_dim, output_dim), jnp.float32, -bound2, bound2)
    b2 = jax.random.uniform(k4, (1, output_dim), jnp.float32, -bound2, bound2)
    return w1, b1, w2, b2


def reference_forward(x, w1, b1, w2, b2):
    h = jnp.maximum(x @ w1 + b1, 0.0)
    return jax.nn.sigmoid(h @ w2 + b2)


if __name__ == "__main__":
    # Small shapes consistent with the module: flattened 16x16 images.
    batch = 8
    image_size = 256   # 16 * 16 flattened image
    hidden_dim = 32
    output_dim = 1

    key = jax.random.PRNGKey(0)
    kx, kp = jax.random.split(key)
    x = jax.random.normal(kx, (batch, image_size), jnp.float32)
    w1, b1, w2, b2 = init_discriminator_params(kp, image_size, hidden_dim, output_dim)

    out = discriminator_forward(x, w1, b1, w2, b2)
    out = jax.block_until_ready(out)

    ref = reference_forward(x, w1, b1, w2, b2)
    assert out.shape == (batch, output_dim), out.shape
    # bf16 MXU inputs + approx reciprocal => looser tolerance than pure-f32.
    assert jnp.allclose(out, ref, atol=2e-2, rtol=2e-2), "mismatch vs reference"

    print("KERNEL_OK")
</pallas_src>

<mosaic_0001>
module attributes {stable_mosaic.version = 11 : i64} {
  func.func @_discriminator_kernel(%arg0: i32, %arg1: memref<8x256xbf16, #tpu.memory_space<vmem>>, %arg2: memref<256x128xbf16, #tpu.memory_space<vmem>>, %arg3: memref<1x128xf32, #tpu.memory_space<vmem>>, %arg4: memref<128x128xbf16, #tpu.memory_space<vmem>>, %arg5: memref<1x128xf32, #tpu.memory_space<vmem>>, %arg6: memref<8x128xf32, #tpu.memory_space<vmem>>) attributes {dimension_semantics = [#tpu.dimension_semantics<parallel>], iteration_bounds = array<i64: 1>, scalar_prefetch = 0 : i64, scratch_operands = 0 : i64, tpu.core_type = #tpu.core_type<tc>, window_params = [{transform_indices = @transform_0, window_bounds = array<i64: 8, 256>}, {pipeline_mode = #tpu.pipeline_mode<synchronous>, transform_indices = @transform_1, window_bounds = array<i64: 256, 128>}, {pipeline_mode = #tpu.pipeline_mode<synchronous>, transform_indices = @transform_2, window_bounds = array<i64: 1, 128>}, {pipeline_mode = #tpu.pipeline_mode<synchronous>, transform_indices = @transform_3, window_bounds = array<i64: 128, 128>}, {pipeline_mode = #tpu.pipeline_mode<synchronous>, transform_indices = @transform_4, window_bounds = array<i64: 1, 128>}, {transform_indices = @transform_5, window_bounds = array<i64: 8, 128>}]} {
    %c0 = arith.constant 0 : index
    %c0_0 = arith.constant 0 : index
    %0 = vector.load %arg1[%c0, %c0_0] : memref<8x256xbf16, #tpu.memory_space<vmem>>, vector<8x256xbf16>
    %c0_1 = arith.constant 0 : index
    %c0_2 = arith.constant 0 : index
    %1 = vector.load %arg2[%c0_1, %c0_2] : memref<256x128xbf16, #tpu.memory_space<vmem>>, vector<256x128xbf16>
    %cst = arith.constant dense<0.000000e+00> : vector<8x128xf32>
    %2 = tpu.matmul %0, %1, %cst {dimension_numbers = #tpu.dot_dimension_numbers<[1], [0], [0], [1], [0, 0, 1, 1], [], []>} : vector<8x256xbf16>, vector<256x128xbf16>, vector<8x128xf32> -> vector<8x128xf32>
    %c0_3 = arith.constant 0 : index
    %c0_4 = arith.constant 0 : index
    %3 = vector.load %arg3[%c0_3, %c0_4] : memref<1x128xf32, #tpu.memory_space<vmem>>, vector<1x128xf32>
    %4 = vector.broadcast %3 : vector<1x128xf32> to vector<8x128xf32>
    %5 = arith.addf %2, %4 : vector<8x128xf32>
    %cst_5 = arith.constant 0.000000e+00 : f32
    %6 = vector.broadcast %cst_5 : f32 to vector<8x128xf32>
    %7 = arith.maximumf %5, %6 : vector<8x128xf32>
    %8 = arith.truncf %7 : vector<8x128xf32> to vector<8x128xbf16>
    %c0_6 = arith.constant 0 : index
    %c0_7 = arith.constant 0 : index
    %9 = vector.load %arg4[%c0_6, %c0_7] : memref<128x128xbf16, #tpu.memory_space<vmem>>, vector<128x128xbf16>
    %cst_8 = arith.constant dense<0.000000e+00> : vector<8x128xf32>
    %10 = tpu.matmul %8, %9, %cst_8 {dimension_numbers = #tpu.dot_dimension_numbers<[1], [0], [0], [1], [0, 0, 1, 1], [], []>} : vector<8x128xbf16>, vector<128x128xbf16>, vector<8x128xf32> -> vector<8x128xf32>
    %c0_9 = arith.constant 0 : index
    %c0_10 = arith.constant 0 : index
    %11 = vector.load %arg5[%c0_9, %c0_10] : memref<1x128xf32, #tpu.memory_space<vmem>>, vector<1x128xf32>
    %12 = vector.broadcast %11 : vector<1x128xf32> to vector<8x128xf32>
    %13 = arith.addf %10, %12 : vector<8x128xf32>
    %cst_11 = arith.constant 0.000000e+00 : f32
    %14 = vector.broadcast %cst_11 : f32 to vector<8x128xf32>
    %15 = arith.subf %14, %13 : vector<8x128xf32>
    %16 = math.exp %15 : vector<8x128xf32>
    %cst_12 = arith.constant 1.000000e+00 : f32
    %17 = vector.broadcast %cst_12 : f32 to vector<8x128xf32>
    %18 = arith.addf %17, %16 : vector<8x128xf32>
    %19 = tpu.reciprocal %18 {approx = true} : vector<8x128xf32> -> vector<8x128xf32>
    %c0_13 = arith.constant 0 : index
    %c0_14 = arith.constant 0 : index
    %20 = vector.load %arg6[%c0_13, %c0_14] : memref<8x128xf32, #tpu.memory_space<vmem>>, vector<8x128xf32>
    tpu.vector_store %arg6[%c0_13, %c0_14], %19 {strides = array<i32>} : memref<8x128xf32, #tpu.memory_space<vmem>>, vector<8x128xf32>,
    return
  }
  func.func @transform_0(%arg0: i32) -> (i32, i32) {
    %c0_i32 = arith.constant 0 : i32
    %c0_i32_0 = arith.constant 0 : i32
    return %arg0, %c0_i32 : i32, i32
  }
  func.func @transform_1(%arg0: i32) -> (i32, i32) {
    %c0_i32 = arith.constant 0 : i32
    %c0_i32_0 = arith.constant 0 : i32
    %c0_i32_1 = arith.constant 0 : i32
    return %c0_i32, %c0_i32_0 : i32, i32
  }
  func.func @transform_2(%arg0: i32) -> (i32, i32) {
    %c0_i32 = arith.constant 0 : i32
    %c0_i32_0 = arith.constant 0 : i32
    %c0_i32_1 = arith.constant 0 : i32
    return %c0_i32, %c0_i32_0 : i32, i32
  }
  func.func @transform_3(%arg0: i32) -> (i32, i32) {
    %c0_i32 = arith.constant 0 : i32
    %c0_i32_0 = arith.constant 0 : i32
    %c0_i32_1 = arith.constant 0 : i32
    return %c0_i32, %c0_i32_0 : i32, i32
  }
  func.func @transform_4(%arg0: i32) -> (i32, i32) {
    %c0_i32 = arith.constant 0 : i32
    %c0_i32_0 = arith.constant 0 : i32
    %c0_i32_1 = arith.constant 0 : i32
    return %c0_i32, %c0_i32_0 : i32, i32
  }
  func.func @transform_5(%arg0: i32) -> (i32, i32) {
    %c0_i32 = arith.constant 0 : i32
    %c0_i32_0 = arith.constant 0 : i32
    return %arg0, %c0_i32 : i32, i32
  }
}

</mosaic_0001>

<llo_original>
// kernel: discriminator_forward.1
$region0: #{discriminator_forward.1}
  #allocation0 [shape = 'u32[]', space=smem, size = 0x4, offset = 0x4, fixed_abs, tag = 'smem constant byte address 0x4 - core index']
  #allocation1 [shape = 'u32[144,128]{1,0:T(1,128)}', space=vmem, size = 0x12000, scoped, tag = 'internal scratch']
  %s0 = inlined_call_operand.vmem [shape: bf16[8,256], index: 0, kind: input, shape index: {}]
  %s1 = inlined_call_operand.vmem [shape: bf16[256,128], index: 1, kind: input, shape index: {}]
  %s2 = inlined_call_operand.vmem [shape: f32[1,128], index: 2, kind: input, shape index: {}]
  %s3 = inlined_call_operand.vmem [shape: bf16[128,128], index: 3, kind: input, shape index: {}]
  %s4 = inlined_call_operand.vmem [shape: f32[1,128], index: 4, kind: input, shape index: {}]
  %s5 = inlined_call_operand.vmem [shape: f32[8,128], index: 5, kind: output, shape index: {}]
  %s6 = sld [smem:[#allocation0]]
  $region30: #{discriminator_forward.1} parent=0
    _
  %s8 = ssub.s32 1, %s6
  %s9 = scalar_select 0, %s8, %s6
  // Predicated region
  $region2: #{discriminator_forward.1} parent=0 // pred_check
    _
  $region3: #{discriminator_forward.1} parent=0 // pred_check_branch
    %11 = sbr.rel (0) target = $region5
  $region4: #{discriminator_forward.1} parent=0 // pred_region
    _
  $region5: #{discriminator_forward.1} parent=0 // pred_fallthru
    _
  // Predicated region
  $region6: #{discriminator_forward.1} parent=0 // pred_check
    _
  $region7: #{discriminator_forward.1} parent=0 // pred_check_branch
    %13 = sbr.rel (0) target = $region9
  $region8: #{discriminator_forward.1} parent=0 // pred_region
    _
  $region9: #{discriminator_forward.1} parent=0 // pred_fallthru
    _
  // Predicated region
  $region10: #{discriminator_forward.1} parent=0 // pred_check
    _
  $region11: #{discriminator_forward.1} parent=0 // pred_check_branch
    %15 = sbr.rel (0) target = $region13
  $region12: #{discriminator_forward.1} parent=0 // pred_region
    _
  $region13: #{discriminator_forward.1} parent=0 // pred_fallthru
    _
  // Predicated region
  $region14: #{discriminator_forward.1} parent=0 // pred_check
    _
  $region15: #{discriminator_forward.1} parent=0 // pred_check_branch
    %17 = sbr.rel (0) target = $region17
  $region16: #{discriminator_forward.1} parent=0 // pred_region
    _
  $region17: #{discriminator_forward.1} parent=0 // pred_fallthru
    _
  // Predicated region
  $region18: #{discriminator_forward.1} parent=0 // pred_check
    _
  $region19: #{discriminator_forward.1} parent=0 // pred_check_branch
    %19 = sbr.rel (0) target = $region21
  $region20: #{discriminator_forward.1} parent=0 // pred_region
    _
  $region21: #{discriminator_forward.1} parent=0 // pred_fallthru
    _
  %v21 = vld [vmem:[%s0] sm:$0xff]
  %v22 = vld [vmem:[%s1] sm:$0xf]
  %v23 = vld [vmem:[%s1 + $0x4] sm:$0xf]
  %v24 = vld [vmem:[%s1 + $0x8] sm:$0xf]
  %v25 = vld [vmem:[%s1 + $0xc] sm:$0xf]
  %v26 = vld [vmem:[%s1 + $0x10] sm:$0xf]
  %v27 = vld [vmem:[%s1 + $0x14] sm:$0xf]
  %v28 = vld [vmem:[%s1 + $0x18] sm:$0xf]
  %v29 = vld [vmem:[%s1 + $0x1c] sm:$0xf]
  %v30 = vld [vmem:[%s1 + $0x20] sm:$0xf]
  %v31 = vld [vmem:[%s1 + $0x24] sm:$0xf]
  %v32 = vld [vmem:[%s1 + $0x28] sm:$0xf]
  %v33 = vld [vmem:[%s1 + $0x2c] sm:$0xf]
  %v34 = vld [vmem:[%s1 + $0x30] sm:$0xf]
  %v35 = vld [vmem:[%s1 + $0x34] sm:$0xf]
  %v36 = vld [vmem:[%s1 + $0x38] sm:$0xf]
  %v37 = vld [vmem:[%s1 + $0x3c] sm:$0xf]
  %v38 = vld [vmem:[%s1 + $0x40] sm:$0xf]
  %v39 = vld [vmem:[%s1 + $0x44] sm:$0xf]
  %v40 = vld [vmem:[%s1 + $0x48] sm:$0xf]
  %v41 = vld [vmem:[%s1 + $0x4c] sm:$0xf]
  %v42 = vld [vmem:[%s1 + $0x50] sm:$0xf]
  %v43 = vld [vmem:[%s1 + $0x54] sm:$0xf]
  %v44 = vld [vmem:[%s1 + $0x58] sm:$0xf]
  %v45 = vld [vmem:[%s1 + $0x5c] sm:$0xf]
  %v46 = vld [vmem:[%s1 + $0x60] sm:$0xf]
  %v47 = vld [vmem:[%s1 + $0x64] sm:$0xf]
  %v48 = vld [vmem:[%s1 + $0x68] sm:$0xf]
  %v49 = vld [vmem:[%s1 + $0x6c] sm:$0xf]
  %v50 = vld [vmem:[%s1 + $0x70] sm:$0xf]
  %v51 = vld [vmem:[%s1 + $0x74] sm:$0xf]
  %v52 = vld [vmem:[%s1 + $0x78] sm:$0xf]
  %v53 = vld [vmem:[%s1 + $0x7c] sm:$0xf]
  %v54 = vld [vmem:[%s2] sm:$0x1]
  %v56 = vlaneseq
  %v57 = vshrl.u32 %v56, 7
  %v58 = vsub.s32 0, %v57
  %v59 = vrot.slane %v54, %v58
  %v62 = vunpack.c.l.b16 %v21
  %v63 = vunpack.c.h.b16 %v21
  %v64 = vpack.c.b16 %v62, %v62
  %v65 = vpack.c.b16 %v63, %v63
  %v100 = vunpack.c.l.b16 %v22
  %v101 = vunpack.c.l.b16 %v23
  %v102 = vunpack.c.l.b16 %v24
  %v103 = vunpack.c.l.b16 %v25
  %v104 = vunpack.c.l.b16 %v26
  %v105 = vunpack.c.l.b16 %v27
  %v106 = vunpack.c.l.b16 %v28
  %v107 = vunpack.c.l.b16 %v29
  %v108 = vunpack.c.l.b16 %v30
  %v109 = vunpack.c.l.b16 %v31
  %v110 = vunpack.c.l.b16 %v32
  %v111 = vunpack.c.l.b16 %v33
  %v112 = vunpack.c.l.b16 %v34
  %v113 = vunpack.c.l.b16 %v35
  %v114 = vunpack.c.l.b16 %v36
  %v115 = vunpack.c.l.b16 %v37
  %v116 = vunpack.c.l.b16 %v38
  %v117 = vunpack.c.l.b16 %v39
  %v118 = vunpack.c.l.b16 %v40
  %v119 = vunpack.c.l.b16 %v41
  %v120 = vunpack.c.l.b16 %v42
  %v121 = vunpack.c.l.b16 %v43
  %v122 = vunpack.c.l.b16 %v44
  %v123 = vunpack.c.l.b16 %v45
  %v124 = vunpack.c.l.b16 %v46
  %v125 = vunpack.c.l.b16 %v47
  %v126 = vunpack.c.l.b16 %v48
  %v127 = vunpack.c.l.b16 %v49
  %v128 = vunpack.c.l.b16 %v50
  %v129 = vunpack.c.l.b16 %v51
  %v130 = vunpack.c.l.b16 %v52
  %v131 = vunpack.c.l.b16 %v53
  %v132 = vpack.c.b16 %v101, %v100
  %v133 = vpack.c.b16 %v103, %v102
  %v134 = vpack.c.b16 %v105, %v104
  %v135 = vpack.c.b16 %v107, %v106
  %v136 = vpack.c.b16 %v109, %v108
  %v137 = vpack.c.b16 %v111, %v110
  %v138 = vpack.c.b16 %v113, %v112
  %v139 = vpack.c.b16 %v115, %v114
  %v140 = vpack.c.b16 %v117, %v116
  %v141 = vpack.c.b16 %v119, %v118
  %v142 = vpack.c.b16 %v121, %v120
  %v143 = vpack.c.b16 %v123, %v122
  %v144 = vpack.c.b16 %v125, %v124
  %v145 = vpack.c.b16 %v127, %v126
  %v146 = vpack.c.b16 %v129, %v128
  %v147 = vpack.c.b16 %v131, %v130
  %164 = vmatprep.subr.bf16.mxu0 0
  %165 = vmatpush1.bf16.msra.mxu0 %v132
  %166 = vmatprep.subr.bf16.mxu0 0
  %167 = vmatpush1.bf16.msra.mxu0 %v133
  %168 = vmatprep.subr.bf16.mxu0 0
  %169 = vmatpush1.bf16.msra.mxu0 %v134
  %170 = vmatprep.subr.bf16.mxu0 0
  %171 = vmatpush1.bf16.msra.mxu0 %v135
  %172 = vmatprep.subr.bf16.mxu0 0
  %173 = vmatpush1.bf16.msra.mxu0 %v136
  %174 = vmatprep.subr.bf16.mxu0 0
  %175 = vmatpush1.bf16.msra.mxu0 %v137
  %176 = vmatprep.subr.bf16.mxu0 0
  %177 = vmatpush1.bf16.msra.mxu0 %v138
  %178 = vmatprep.subr.bf16.mxu0 0
  %179 = vmatpush1.bf16.msra.mxu0 %v139
  %180 = vmatprep.subr.bf16.mxu0 0
  %181 = vmatpush1.bf16.msra.mxu0 %v140
  %182 = vmatprep.subr.bf16.mxu0 0
  %183 = vmatpush1.bf16.msra.mxu0 %v141
  %184 = vmatprep.subr.bf16.mxu0 0
  %185 = vmatpush1.bf16.msra.mxu0 %v142
  %186 = vmatprep.subr.bf16.mxu0 0
  %187 = vmatpush1.bf16.msra.mxu0 %v143
  %188 = vmatprep.subr.bf16.mxu0 0
  %189 = vmatpush1.bf16.msra.mxu0 %v144
  %190 = vmatprep.subr.bf16.mxu0 0
  %191 = vmatpush1.bf16.msra.mxu0 %v145
  %192 = vmatprep.subr.bf16.mxu0 0
  %193 = vmatpush1.bf16.msra.mxu0 %v146
  %194 = vmatprep.subr.bf16.mxu0 0
  %195 = vmatpush1.bf16.msra.mxu0 %v147
  %196 = vmatprep.mubr.bf16.mxu0 %v65
  %197 = vmatmul.mubr.bf16.gmra.mrb[0].mxu0 %v64
  %v198 = vpop.f32.mrb[0].mxu0
  %v199 = vadd.f32 %v59, %v198
  %v200 = vpop.f32.mrb[0].mxu0
  %v201 = vpop.f32.mrb[0].mxu0
  %v202 = vpop.f32.mrb[0].mxu0
  %203 = vdwg.mxu0
  %v204 = vmax.f32 %v199, 0.0
  %v205 = vpack.c.bf16 %v204, %v204
  %v206 = vld [vmem:[%s3] sm:$0xf]
  %v207 = vld [vmem:[%s3 + $0x4] sm:$0xf]
  %v208 = vld [vmem:[%s3 + $0x8] sm:$0xf]
  %v209 = vld [vmem:[%s3 + $0xc] sm:$0xf]
  %v210 = vld [vmem:[%s3 + $0x10] sm:$0xf]
  %v211 = vld [vmem:[%s3 + $0x14] sm:$0xf]
  %v212 = vld [vmem:[%s3 + $0x18] sm:$0xf]
  %v213 = vld [vmem:[%s3 + $0x1c] sm:$0xf]
  %v214 = vld [vmem:[%s3 + $0x20] sm:$0xf]
  %v215 = vld [vmem:[%s3 + $0x24] sm:$0xf]
  %v216 = vld [vmem:[%s3 + $0x28] sm:$0xf]
  %v217 = vld [vmem:[%s3 + $0x2c] sm:$0xf]
  %v218 = vld [vmem:[%s3 + $0x30] sm:$0xf]
  %v219 = vld [vmem:[%s3 + $0x34] sm:$0xf]
  %v220 = vld [vmem:[%s3 + $0x38] sm:$0xf]
  %v221 = vld [vmem:[%s3 + $0x3c] sm:$0xf]
  %v222 = vld [vmem:[%s4] sm:$0x1]
  %v224 = vlaneseq
  %v225 = vshrl.u32 %v224, 7
  %v226 = vsub.s32 0, %v225
  %v227 = vrot.slane %v222, %v226
  %v245 = vunpack.c.l.b16 %v206
  %v246 = vunpack.c.l.b16 %v207
  %v247 = vunpack.c.l.b16 %v208
  %v248 = vunpack.c.l.b16 %v209
  %v249 = vunpack.c.l.b16 %v210
  %v250 = vunpack.c.l.b16 %v211
  %v251 = vunpack.c.l.b16 %v212
  %v252 = vunpack.c.l.b16 %v213
  %v253 = vunpack.c.l.b16 %v214
  %v254 = vunpack.c.l.b16 %v215
  %v255 = vunpack.c.l.b16 %v216
  %v256 = vunpack.c.l.b16 %v217
  %v257 = vunpack.c.l.b16 %v218
  %v258 = vunpack.c.l.b16 %v219
  %v259 = vunpack.c.l.b16 %v220
  %v260 = vunpack.c.l.b16 %v221
  %v261 = vpack.c.b16 %v246, %v245
  %v262 = vpack.c.b16 %v248, %v247
  %v263 = vpack.c.b16 %v250, %v249
  %v264 = vpack.c.b16 %v252, %v251
  %v265 = vpack.c.b16 %v254, %v253
  %v266 = vpack.c.b16 %v256, %v255
  %v267 = vpack.c.b16 %v258, %v257
  %v268 = vpack.c.b16 %v260, %v259
  %277 = vmatprep.subr.bf16.mxu0 0
  %278 = vmatpush1.bf16.msra.mxu0 %v261
  %279 = vmatprep.subr.bf16.mxu0 0
  %280 = vmatpush1.bf16.msra.mxu0 %v262
  %281 = vmatprep.subr.bf16.mxu0 0
  %282 = vmatpush1.bf16.msra.mxu0 %v263
  %283 = vmatprep.subr.bf16.mxu0 0
  %284 = vmatpush1.bf16.msra.mxu0 %v264
  %285 = vmatprep.subr.bf16.mxu0 0
  %286 = vmatpush1.bf16.msra.mxu0 %v265
  %287 = vmatprep.subr.bf16.mxu0 0
  %288 = vmatpush1.bf16.msra.mxu0 %v266
  %289 = vmatprep.subr.bf16.mxu0 0
  %290 = vmatpush1.bf16.msra.mxu0 %v267
  %291 = vmatprep.subr.bf16.mxu0 0
  %292 = vmatpush1.bf16.msra.mxu0 %v268
  %293 = vmatprep.subr.bf16.mxu0 0
  %294 = vmatpush1.bf16.msra.mxu0 0
  %295 = vmatprep.subr.bf16.mxu0 0
  %296 = vmatpush1.bf16.msra.mxu0 0
  %297 = vmatprep.subr.bf16.mxu0 0
  %298 = vmatpush1.bf16.msra.mxu0 0
  %299 = vmatprep.subr.bf16.mxu0 0
  %300 = vmatpush1.bf16.msra.mxu0 0
  %301 = vmatprep.subr.bf16.mxu0 0
  %302 = vmatpush1.bf16.msra.mxu0 0
  %303 = vmatprep.subr.bf16.mxu0 0
  %304 = vmatpush1.bf16.msra.mxu0 0
  %305 = vmatprep.subr.bf16.mxu0 0
  %306 = vmatpush1.bf16.msra.mxu0 0
  %307 = vmatprep.subr.bf16.mxu0 0
  %308 = vmatpush1.bf16.msra.mxu0 0
  %309 = vmatprep.mubr.bf16.mxu0 0
  %310 = vmatmul.mubr.bf16.gmra.mrb[0].mxu0 %v205
  %v311 = vpop.f32.mrb[0].mxu0
  %v312 = vadd.f32 %v227, %v311
  %v313 = vpop.f32.mrb[0].mxu0
  %v314 = vpop.f32.mrb[0].mxu0
  %v315 = vpop.f32.mrb[0].mxu0
  %316 = vdwg.mxu0
  %v317 = vsub.f32 0.0, %v312
  %v318 = vmul.f32 %v317, 1.442695
  %v319 = vpow.pop %v318
  %v320 = vadd.f32 %v319, 1.0
  %v321 = vrcp.pop %v320
  %322 = vst [vmem:[%s5] sm:$0xff] %v321
  // Predicated region
  $region22: #{discriminator_forward.1} parent=0 // pred_check
    _
  $region23: #{discriminator_forward.1} parent=0 // pred_check_branch
    %324 = sbr.rel (0) target = $region25
  $region24: #{discriminator_forward.1} parent=0 // pred_region
    _
  $region25: #{discriminator_forward.1} parent=0 // pred_fallthru
    _
  // Predicated region
  $region26: #{discriminator_forward.1} parent=0 // pred_check
    _
  $region27: #{discriminator_forward.1} parent=0 // pred_check_branch
    %326 = sbr.rel (0) target = $region29
  $region28: #{discriminator_forward.1} parent=0 // pred_region
    _
  $region29: #{discriminator_forward.1} parent=0 // pred_fallthru
    _

</llo_original>
